<compile_context>
chip_gen: v5e
topology: v5e:2x2
jax: 0.10.0
libtpu: 0.0.40
codegen_flags: <defaults>
</compile_context>

<pallas_src>
import functools

import jax
import jax.numpy as jnp
from jax import lax
from jax.experimental import pallas as pl
from jax.experimental.pallas import tpu as pltpu

HIDDEN = 64
N_HIDDEN_LAYERS = 5


def _round_up(x, m):
    return ((x + m - 1) // m) * m


def _device_kind():
    try:
        return jax.devices()[0].device_kind.lower()
    except Exception:  # pragma: no cover - CPU / interpret fallback
        return ""


def mlp_kernel(x_ref, w_in_ref, b_in_ref, w_h_ref, b_h_ref, w_out_ref,
               b_out_ref, o_ref, *, bf16_relu):
    # x_ref:     (tile_b, D_in)  f32    -- natural layout, batch on sublanes
    # w_in_ref:  (64, D_in)      bf16   (PyTorch (out, in) layout)
    # b_in_ref:  (64, 1)         f32
    # w_h_ref:   (5, 64, 64)     bf16
    # b_h_ref:   (5, 64, 1)      f32
    # w_out_ref: (64, 1)         f32    (torch (1, 64) weight stored as a column)
    # b_out_ref: (1, 1)          f32    in SMEM
    # o_ref:     (1, tile_b)     f32    lane-dense output row

    xb = x_ref[...].astype(jnp.bfloat16)

    # input_fc: contract D_in of w_in with D_in of x -> (64, tile_b), i.e. the
    # batch lands on lanes.  NO activation here (matches the PyTorch forward).
    h32 = lax.dot_general(
        w_in_ref[...], xb,
        dimension_numbers=(((1,), (1,)), ((), ())),
        preferred_element_type=jnp.float32) + b_in_ref[...]
    hb = h32.astype(jnp.bfloat16)

    # 5 x [Linear(64, 64) + ReLU]; bf16 MXU matmuls with f32 accumulation.
    # ReLU is applied in bf16 after the downcast on bf16-VALU chips
    # (numerically identical to relu-then-cast since rounding preserves sign).
    for i in range(N_HIDDEN_LAYERS):
        h32 = jnp.dot(w_h_ref[i], hb,
                      preferred_element_type=jnp.float32) + b_h_ref[i]
        if bf16_relu:
            hb = jnp.maximum(h32.astype(jnp.bfloat16), 0)
        else:
            hb = jnp.maximum(h32, 0.0).astype(jnp.bfloat16)

    # ReLU of the final hidden layer in f32 for the output reduce (the bf16
    # copy from the last loop iteration is dead and gets DCE'd).
    h = jnp.maximum(h32, 0.0)

    # output_fc (64 -> 1): VPU multiply + sublane reduce -> (1, tile_b) row.
    out = jnp.sum(h * w_out_ref[...], axis=0, keepdims=True)
    o_ref[...] = (out + b_out_ref[0, 0]).astype(o_ref.dtype)


@functools.partial(jax.jit, static_argnames=("tile_b",))
def mlp_forward(x, params, tile_b=2048):
    """x: (B, D_in) float32. params: dict produced by init_params."""
    B, D_in = x.shape

    kind = _device_kind()
    bf16_relu = "v5" not in kind          # v6e / v7x have bf16 VALU
    multicore = "v7" in kind              # v7x: 2 TensorCores per chip

    # --- Tile selection -----------------------------------------------------
    # Lane-dense output => tile is a multiple of 128.  Cap the tile so the
    # double-buffered f32 x block (2 * tile * D_in * 4B) stays <= ~16 MiB,
    # comfortably inside scoped VMEM on v5e/v6e/v7x.
    vmem_cap = max(128, ((16 << 20) // (8 * D_in)) // 128 * 128)
    tile_cap = max(128, min(tile_b, vmem_cap))

    b128 = _round_up(B, 128)
    num_tiles = pl.cdiv(b128, tile_cap)
    if multicore and num_tiles > 1 and num_tiles % 2:
        num_tiles += 1                    # even split across v7x's 2 TCs
    tile = _round_up(pl.cdiv(b128, num_tiles), 128)   # balanced, <= tile_cap
    b_pad = num_tiles * tile
    grid = (num_tiles,)

    # Pad only the ragged remainder (no transpose, no dtype pass over x).
    if b_pad != B:
        x_in = jnp.zeros((b_pad, D_in), x.dtype).at[:B].set(x)
    else:
        x_in = x

    w_in, b_in = params["w_in"], params["b_in"]      # (64, D_in) bf16, (64,1) f32
    w_h, b_h = params["w_h"], params["b_h"]          # (5,64,64) bf16, (5,64,1) f32
    w_out, b_out = params["w_out"], params["b_out"]  # (64,1) f32, (1,1) f32

    out = pl.pallas_call(
        functools.partial(mlp_kernel, bf16_relu=bf16_relu),
        out_shape=jax.ShapeDtypeStruct((1, b_pad), jnp.float32),
        grid_spec=pltpu.PrefetchScalarGridSpec(
            num_scalar_prefetch=0,
            grid=grid,
            in_specs=[
                pl.BlockSpec((tile, D_in), lambda i: (i, 0)),            # x tile
                pl.BlockSpec((HIDDEN, D_in), lambda i: (0, 0)),          # w_in
                pl.BlockSpec((HIDDEN, 1), lambda i: (0, 0)),             # b_in
                pl.BlockSpec((N_HIDDEN_LAYERS, HIDDEN, HIDDEN),
                             lambda i: (0, 0, 0)),                       # w_h
                pl.BlockSpec((N_HIDDEN_LAYERS, HIDDEN, 1),
                             lambda i: (0, 0, 0)),                       # b_h
                pl.BlockSpec((HIDDEN, 1), lambda i: (0, 0)),             # w_out
                pl.BlockSpec(memory_space=pltpu.MemorySpace.SMEM),       # b_out
            ],
            out_specs=pl.BlockSpec((1, tile), lambda i: (0, i)),         # lane-dense
        ),
        compiler_params=pltpu.CompilerParams(
            dimension_semantics=("parallel",)),
    )(x_in, w_in, b_in, w_h, b_h, w_out, b_out)

    # Layout plumbing only: (1, b_pad) -> (B, 1), dropping padded columns.
    return out.reshape(-1)[:B].reshape(B, 1)


def init_params(key, input_size):
    """Deterministic synthetic params in PyTorch nn.Linear (out, in) layout.
    Matmul weights are stored in bf16 (f32 accumulation in the kernel),
    biases in f32."""
    ks = jax.random.split(key, 4 + 2 * N_HIDDEN_LAYERS)
    scale = 0.1
    params = {
        "w_in": (scale * jax.random.normal(ks[0], (HIDDEN, input_size),
                                           jnp.float32)).astype(jnp.bfloat16),
        "b_in": scale * jax.random.normal(ks[1], (HIDDEN, 1), jnp.float32),
        "w_h": jnp.stack([
            (scale * jax.random.normal(ks[2 + i], (HIDDEN, HIDDEN),
                                       jnp.float32)).astype(jnp.bfloat16)
            for i in range(N_HIDDEN_LAYERS)
        ]),
        "b_h": jnp.stack([
            scale * jax.random.normal(ks[2 + N_HIDDEN_LAYERS + i], (HIDDEN, 1),
                                      jnp.float32)
            for i in range(N_HIDDEN_LAYERS)
        ]),
        # output_fc weight (torch shape (1, 64)) stored as a (64, 1) column.
        "w_out": scale * jax.random.normal(ks[2 + 2 * N_HIDDEN_LAYERS],
                                           (HIDDEN, 1), jnp.float32),
        "b_out": scale * jax.random.normal(ks[3 + 2 * N_HIDDEN_LAYERS],
                                           (1, 1), jnp.float32),
    }
    return params


def mlp_reference(x, params):
    """Pure-JAX reference identical to the PyTorch forward.  Uses the same
    bf16-rounded operands as the kernel (upcast to f32) so only accumulation
    order differs."""
    with jax.default_matmul_precision("highest"):
        xf = x.astype(jnp.bfloat16).astype(jnp.float32)
        h = xf @ params["w_in"].astype(jnp.float32).T + params["b_in"].T
        for i in range(N_HIDDEN_LAYERS):
            h = h @ params["w_h"][i].astype(jnp.float32).T + params["b_h"][i].T
            h = jnp.maximum(h, 0.0)
        return h @ params["w_out"] + params["b_out"]


if __name__ == "__main__":
    key = jax.random.PRNGKey(0)
    k_x, k_p = jax.random.split(key)

    batch, input_size = 8, 16
    x = jax.random.normal(k_x, (batch, input_size), jnp.float32)
    params = init_params(k_p, input_size)

    out = mlp_forward(x, params)
    jax.block_until_ready(out)

    ref = mlp_reference(x, params)
    assert out.shape == (batch, 1)
    assert jnp.allclose(out, ref, atol=1e-3, rtol=1e-3), "mismatch vs reference"

    print("KERNEL_OK")
</pallas_src>

<mosaic_0001>
module attributes {stable_mosaic.version = 11 : i64} {
  func.func @mlp_kernel(%arg0: i32, %arg1: memref<128x16xf32, #tpu.memory_space<vmem>>, %arg2: memref<64x16xbf16, #tpu.memory_space<vmem>>, %arg3: memref<64x1xf32, #tpu.memory_space<vmem>>, %arg4: memref<5x64x64xbf16, #tpu.memory_space<vmem>>, %arg5: memref<5x64x1xf32, #tpu.memory_space<vmem>>, %arg6: memref<64x1xf32, #tpu.memory_space<vmem>>, %arg7: memref<1x1xf32, #tpu.memory_space<smem>>, %arg8: memref<1x128xf32, #tpu.memory_space<vmem>>) attributes {dimension_semantics = [#tpu.dimension_semantics<parallel>], iteration_bounds = array<i64: 1>, scalar_prefetch = 0 : i64, scratch_operands = 0 : i64, tpu.core_type = #tpu.core_type<tc>, window_params = [{transform_indices = @transform_0, window_bounds = array<i64: 128, 16>}, {pipeline_mode = #tpu.pipeline_mode<synchronous>, transform_indices = @transform_1, window_bounds = array<i64: 64, 16>}, {pipeline_mode = #tpu.pipeline_mode<synchronous>, transform_indices = @transform_2, window_bounds = array<i64: 64, 1>}, {pipeline_mode = #tpu.pipeline_mode<synchronous>, transform_indices = @transform_3, window_bounds = array<i64: 5, 64, 64>}, {pipeline_mode = #tpu.pipeline_mode<synchronous>, transform_indices = @transform_4, window_bounds = array<i64: 5, 64, 1>}, {pipeline_mode = #tpu.pipeline_mode<synchronous>, transform_indices = @transform_5, window_bounds = array<i64: 64, 1>}, {transform_indices = @transform_6, window_bounds = array<i64: 1, 1>}, {transform_indices = @transform_7, window_bounds = array<i64: 1, 128>}]} {
    %c0 = arith.constant 0 : index
    %c0_0 = arith.constant 0 : index
    %0 = vector.load %arg1[%c0, %c0_0] : memref<128x16xf32, #tpu.memory_space<vmem>>, vector<128x16xf32>
    %1 = arith.truncf %0 : vector<128x16xf32> to vector<128x16xbf16>
    %c0_1 = arith.constant 0 : index
    %c0_2 = arith.constant 0 : index
    %2 = vector.load %arg2[%c0_1, %c0_2] : memref<64x16xbf16, #tpu.memory_space<vmem>>, vector<64x16xbf16>
    %cst = arith.constant dense<0.000000e+00> : vector<64x128xf32>
    %3 = tpu.matmul %2, %1, %cst {dimension_numbers = #tpu.dot_dimension_numbers<[1], [1], [0], [0], [0, 0, 1, 0], [], []>} : vector<64x16xbf16>, vector<128x16xbf16>, vector<64x128xf32> -> vector<64x128xf32>
    %c0_3 = arith.constant 0 : index
    %c0_4 = arith.constant 0 : index
    %4 = vector.load %arg3[%c0_3, %c0_4] : memref<64x1xf32, #tpu.memory_space<vmem>>, vector<64x1xf32>
    %5 = vector.broadcast %4 : vector<64x1xf32> to vector<64x128xf32>
    %6 = arith.addf %3, %5 : vector<64x128xf32>
    %7 = arith.truncf %6 : vector<64x128xf32> to vector<64x128xbf16>
    %c0_5 = arith.constant 0 : index
    %c0_6 = arith.constant 0 : index
    %c0_7 = arith.constant 0 : index
    %8 = vector.load %arg4[%c0_5, %c0_6, %c0_7] : memref<5x64x64xbf16, #tpu.memory_space<vmem>>, vector<1x64x64xbf16>
    %9 = vector.shape_cast %8 : vector<1x64x64xbf16> to vector<64x64xbf16>
    %cst_8 = arith.constant dense<0.000000e+00> : vector<64x128xf32>
    %10 = tpu.matmul %9, %7, %cst_8 {dimension_numbers = #tpu.dot_dimension_numbers<[1], [0], [0], [1], [0, 0, 1, 1], [], []>} : vector<64x64xbf16>, vector<64x128xbf16>, vector<64x128xf32> -> vector<64x128xf32>
    %c0_9 = arith.constant 0 : index
    %c0_10 = arith.constant 0 : index
    %c0_11 = arith.constant 0 : index
    %11 = vector.load %arg5[%c0_9, %c0_10, %c0_11] : memref<5x64x1xf32, #tpu.memory_space<vmem>>, vector<1x64x1xf32>
    %12 = vector.shape_cast %11 : vector<1x64x1xf32> to vector<64x1xf32>
    %13 = vector.broadcast %12 : vector<64x1xf32> to vector<64x128xf32>
    %14 = arith.addf %10, %13 : vector<64x128xf32>
    %15 = arith.truncf %14 : vector<64x128xf32> to vector<64x128xbf16>
    %cst_12 = arith.constant 0.000000e+00 : bf16
    %16 = vector.broadcast %cst_12 : bf16 to vector<64x128xbf16>
    %17 = arith.maximumf %15, %16 : vector<64x128xbf16>
    %c1 = arith.constant 1 : index
    %c0_13 = arith.constant 0 : index
    %c0_14 = arith.constant 0 : index
    %18 = vector.load %arg4[%c1, %c0_13, %c0_14] : memref<5x64x64xbf16, #tpu.memory_space<vmem>>, vector<1x64x64xbf16>
    %19 = vector.shape_cast %18 : vector<1x64x64xbf16> to vector<64x64xbf16>
    %cst_15 = arith.constant dense<0.000000e+00> : vector<64x128xf32>
    %20 = tpu.matmul %19, %17, %cst_15 {dimension_numbers = #tpu.dot_dimension_numbers<[1], [0], [0], [1], [0, 0, 1, 1], [], []>} : vector<64x64xbf16>, vector<64x128xbf16>, vector<64x128xf32> -> vector<64x128xf32>
    %c1_16 = arith.constant 1 : index
    %c0_17 = arith.constant 0 : index
    %c0_18 = arith.constant 0 : index
    %21 = vector.load %arg5[%c1_16, %c0_17, %c0_18] : memref<5x64x1xf32, #tpu.memory_space<vmem>>, vector<1x64x1xf32>
    %22 = vector.shape_cast %21 : vector<1x64x1xf32> to vector<64x1xf32>
    %23 = vector.broadcast %22 : vector<64x1xf32> to vector<64x128xf32>
    %24 = arith.addf %20, %23 : vector<64x128xf32>
    %25 = arith.truncf %24 : vector<64x128xf32> to vector<64x128xbf16>
    %cst_19 = arith.constant 0.000000e+00 : bf16
    %26 = vector.broadcast %cst_19 : bf16 to vector<64x128xbf16>
    %27 = arith.maximumf %25, %26 : vector<64x128xbf16>
    %c2 = arith.constant 2 : index
    %c0_20 = arith.constant 0 : index
    %c0_21 = arith.constant 0 : index
    %28 = vector.load %arg4[%c2, %c0_20, %c0_21] : memref<5x64x64xbf16, #tpu.memory_space<vmem>>, vector<1x64x64xbf16>
    %29 = vector.shape_cast %28 : vector<1x64x64xbf16> to vector<64x64xbf16>
    %cst_22 = arith.constant dense<0.000000e+00> : vector<64x128xf32>
    %30 = tpu.matmul %29, %27, %cst_22 {dimension_numbers = #tpu.dot_dimension_numbers<[1], [0], [0], [1], [0, 0, 1, 1], [], []>} : vector<64x64xbf16>, vector<64x128xbf16>, vector<64x128xf32> -> vector<64x128xf32>
    %c2_23 = arith.constant 2 : index
    %c0_24 = arith.constant 0 : index
    %c0_25 = arith.constant 0 : index
    %31 = vector.load %arg5[%c2_23, %c0_24, %c0_25] : memref<5x64x1xf32, #tpu.memory_space<vmem>>, vector<1x64x1xf32>
    %32 = vector.shape_cast %31 : vector<1x64x1xf32> to vector<64x1xf32>
    %33 = vector.broadcast %32 : vector<64x1xf32> to vector<64x128xf32>
    %34 = arith.addf %30, %33 : vector<64x128xf32>
    %35 = arith.truncf %34 : vector<64x128xf32> to vector<64x128xbf16>
    %cst_26 = arith.constant 0.000000e+00 : bf16
    %36 = vector.broadcast %cst_26 : bf16 to vector<64x128xbf16>
    %37 = arith.maximumf %35, %36 : vector<64x128xbf16>
    %c3 = arith.constant 3 : index
    %c0_27 = arith.constant 0 : index
    %c0_28 = arith.constant 0 : index
    %38 = vector.load %arg4[%c3, %c0_27, %c0_28] : memref<5x64x64xbf16, #tpu.memory_space<vmem>>, vector<1x64x64xbf16>
    %39 = vector.shape_cast %38 : vector<1x64x64xbf16> to vector<64x64xbf16>
    %cst_29 = arith.constant dense<0.000000e+00> : vector<64x128xf32>
    %40 = tpu.matmul %39, %37, %cst_29 {dimension_numbers = #tpu.dot_dimension_numbers<[1], [0], [0], [1], [0, 0, 1, 1], [], []>} : vector<64x64xbf16>, vector<64x128xbf16>, vector<64x128xf32> -> vector<64x128xf32>
    %c3_30 = arith.constant 3 : index
    %c0_31 = arith.constant 0 : index
    %c0_32 = arith.constant 0 : index
    %41 = vector.load %arg5[%c3_30, %c0_31, %c0_32] : memref<5x64x1xf32, #tpu.memory_space<vmem>>, vector<1x64x1xf32>
    %42 = vector.shape_cast %41 : vector<1x64x1xf32> to vector<64x1xf32>
    %43 = vector.broadcast %42 : vector<64x1xf32> to vector<64x128xf32>
    %44 = arith.addf %40, %43 : vector<64x128xf32>
    %45 = arith.truncf %44 : vector<64x128xf32> to vector<64x128xbf16>
    %cst_33 = arith.constant 0.000000e+00 : bf16
    %46 = vector.broadcast %cst_33 : bf16 to vector<64x128xbf16>
    %47 = arith.maximumf %45, %46 : vector<64x128xbf16>
    %c4 = arith.constant 4 : index
    %c0_34 = arith.constant 0 : index
    %c0_35 = arith.constant 0 : index
    %48 = vector.load %arg4[%c4, %c0_34, %c0_35] : memref<5x64x64xbf16, #tpu.memory_space<vmem>>, vector<1x64x64xbf16>
    %49 = vector.shape_cast %48 : vector<1x64x64xbf16> to vector<64x64xbf16>
    %cst_36 = arith.constant dense<0.000000e+00> : vector<64x128xf32>
    %50 = tpu.matmul %49, %47, %cst_36 {dimension_numbers = #tpu.dot_dimension_numbers<[1], [0], [0], [1], [0, 0, 1, 1], [], []>} : vector<64x64xbf16>, vector<64x128xbf16>, vector<64x128xf32> -> vector<64x128xf32>
    %c4_37 = arith.constant 4 : index
    %c0_38 = arith.constant 0 : index
    %c0_39 = arith.constant 0 : index
    %51 = vector.load %arg5[%c4_37, %c0_38, %c0_39] : memref<5x64x1xf32, #tpu.memory_space<vmem>>, vector<1x64x1xf32>
    %52 = vector.shape_cast %51 : vector<1x64x1xf32> to vector<64x1xf32>
    %53 = vector.broadcast %52 : vector<64x1xf32> to vector<64x128xf32>
    %54 = arith.addf %50, %53 : vector<64x128xf32>
    %cst_40 = arith.constant 0.000000e+00 : f32
    %55 = vector.broadcast %cst_40 : f32 to vector<64x128xf32>
    %56 = arith.maximumf %54, %55 : vector<64x128xf32>
    %c0_41 = arith.constant 0 : index
    %c0_42 = arith.constant 0 : index
    %57 = vector.load %arg6[%c0_41, %c0_42] : memref<64x1xf32, #tpu.memory_space<vmem>>, vector<64x1xf32>
    %58 = vector.broadcast %57 : vector<64x1xf32> to vector<64x128xf32>
    %59 = arith.mulf %56, %58 : vector<64x128xf32>
    %cst_43 = arith.constant dense<0.000000e+00> : vector<128xf32>
    %60 = vector.multi_reduction <add>, %59, %cst_43 [0] : vector<64x128xf32> to vector<128xf32>
    %61 = vector.shape_cast %60 : vector<128xf32> to vector<1x128xf32>
    %c0_44 = arith.constant 0 : index
    %c0_45 = arith.constant 0 : index
    %62 = memref.load %arg7[%c0_44, %c0_45] : memref<1x1xf32, #tpu.memory_space<smem>>
    %63 = vector.broadcast %62 : f32 to vector<1x128xf32>
    %64 = arith.addf %61, %63 : vector<1x128xf32>
    %c0_46 = arith.constant 0 : index
    %c0_47 = arith.constant 0 : index
    %65 = vector.load %arg8[%c0_46, %c0_47] : memref<1x128xf32, #tpu.memory_space<vmem>>, vector<1x128xf32>
    tpu.vector_store %arg8[%c0_46, %c0_47], %64 {strides = array<i32>} : memref<1x128xf32, #tpu.memory_space<vmem>>, vector<1x128xf32>,
    return
  }
  func.func @transform_0(%arg0: i32) -> (i32, i32) {
    %c0_i32 = arith.constant 0 : i32
    %c0_i32_0 = arith.constant 0 : i32
    return %arg0, %c0_i32 : i32, i32
  }
  func.func @transform_1(%arg0: i32) -> (i32, i32) {
    %c0_i32 = arith.constant 0 : i32
    %c0_i32_0 = arith.constant 0 : i32
    %c0_i32_1 = arith.constant 0 : i32
    return %c0_i32, %c0_i32_0 : i32, i32
  }
  func.func @transform_2(%arg0: i32) -> (i32, i32) {
    %c0_i32 = arith.constant 0 : i32
    %c0_i32_0 = arith.constant 0 : i32
    %c0_i32_1 = arith.constant 0 : i32
    return %c0_i32, %c0_i32_0 : i32, i32
  }
  func.func @transform_3(%arg0: i32) -> (i32, i32, i32) {
    %c0_i32 = arith.constant 0 : i32
    %c0_i32_0 = arith.constant 0 : i32
    %c0_i32_1 = arith.constant 0 : i32
    %c0_i32_2 = arith.constant 0 : i32
    return %c0_i32, %c0_i32_0, %c0_i32_1 : i32, i32, i32
  }
  func.func @transform_4(%arg0: i32) -> (i32, i32, i32) {
    %c0_i32 = arith.constant 0 : i32
    %c0_i32_0 = arith.constant 0 : i32
    %c0_i32_1 = arith.constant 0 : i32
    %c0_i32_2 = arith.constant 0 : i32
    return %c0_i32, %c0_i32_0, %c0_i32_1 : i32, i32, i32
  }
  func.func @transform_5(%arg0: i32) -> (i32, i32) {
    %c0_i32 = arith.constant 0 : i32
    %c0_i32_0 = arith.constant 0 : i32
    %c0_i32_1 = arith.constant 0 : i32
    return %c0_i32, %c0_i32_0 : i32, i32
  }
  func.func @transform_6(%arg0: i32) -> (i32, i32) {
    %c0_i32 = arith.constant 0 : i32
    %c0_i32_0 = arith.constant 0 : i32
    %c0_i32_1 = arith.constant 0 : i32
    return %c0_i32, %c0_i32_0 : i32, i32
  }
  func.func @transform_7(%arg0: i32) -> (i32, i32) {
    %c0_i32 = arith.constant 0 : i32
    %c0_i32_0 = arith.constant 0 : i32
    return %c0_i32, %arg0 : i32, i32
  }
}

</mosaic_0001>

<llo_original>
// kernel: mlp_forward.1
$region0: #{mlp_forward.1}
  #allocation0 [shape = 'u32[]', space=smem, size = 0x4, offset = 0x4, fixed_abs, tag = 'smem constant byte address 0x4 - core index']
  #allocation1 [shape = 'u32[72,128]{1,0:T(1,128)}', space=vmem, size = 0x9000, scoped, tag = 'internal scratch']
  #allocation2 [shape = 'f32[1,1]{1,0:T(1,128)S(6)}', space=smem, size = 0x200, scoped, tag = 'scoped memory for mlp_forward.1']
  %s0 = inlined_call_operand.vmem [shape: f32[128,16], index: 0, kind: input, shape index: {}]
  %s1 = inlined_call_operand.vmem [shape: bf16[64,16], index: 1, kind: input, shape index: {}]
  %s2 = inlined_call_operand.vmem [shape: f32[64,1], index: 2, kind: input, shape index: {}]
  %s3 = inlined_call_operand.vmem [shape: bf16[5,64,64], index: 3, kind: input, shape index: {}]
  %s4 = inlined_call_operand.vmem [shape: f32[5,64,1], index: 4, kind: input, shape index: {}]
  %s5 = inlined_call_operand.vmem [shape: f32[64,1], index: 5, kind: input, shape index: {}]
  %s6 = inlined_call_operand.<no memory space> [shape: f32[1,1], index: 6, kind: input, shape index: {}]
  %s7 = inlined_call_operand.vmem [shape: f32[1,128], index: 7, kind: output, shape index: {}]
  %s8 = sld [smem:[#allocation0]]
  $region38: #{mlp_forward.1} parent=0
    _
  %s10 = ssub.s32 1, %s8
  %s11 = scalar_select 0, %s10, %s8
  %12 = sst [smem:[#allocation2]] %s6
  // Predicated region
  $region2: #{mlp_forward.1} parent=0 // pred_check
    _
  $region3: #{mlp_forward.1} parent=0 // pred_check_branch
    %14 = sbr.rel (0) target = $region5
  $region4: #{mlp_forward.1} parent=0 // pred_region
    _
  $region5: #{mlp_forward.1} parent=0 // pred_fallthru
    _
  // Predicated region
  $region6: #{mlp_forward.1} parent=0 // pred_check
    _
  $region7: #{mlp_forward.1} parent=0 // pred_check_branch
    %16 = sbr.rel (0) target = $region9
  $region8: #{mlp_forward.1} parent=0 // pred_region
    _
  $region9: #{mlp_forward.1} parent=0 // pred_fallthru
    _
  // Predicated region
  $region10: #{mlp_forward.1} parent=0 // pred_check
    _
  $region11: #{mlp_forward.1} parent=0 // pred_check_branch
    %18 = sbr.rel (0) target = $region13
  $region12: #{mlp_forward.1} parent=0 // pred_region
    _
  $region13: #{mlp_forward.1} parent=0 // pred_fallthru
    _
  // Predicated region
  $region14: #{mlp_forward.1} parent=0 // pred_check
    _
  $region15: #{mlp_forward.1} parent=0 // pred_check_branch
    %20 = sbr.rel (0) target = $region17
  $region16: #{mlp_forward.1} parent=0 // pred_region
    _
  $region17: #{mlp_forward.1} parent=0 // pred_fallthru
    _
  // Predicated region
  $region18: #{mlp_forward.1} parent=0 // pred_check
    _
  $region19: #{mlp_forward.1} parent=0 // pred_check_branch
    %22 = sbr.rel (0) target = $region21
  $region20: #{mlp_forward.1} parent=0 // pred_region
    _
  $region21: #{mlp_forward.1} parent=0 // pred_fallthru
    _
  // Predicated region
  $region22: #{mlp_forward.1} parent=0 // pred_check
    _
  $region23: #{mlp_forward.1} parent=0 // pred_check_branch
    %24 = sbr.rel (0) target = $region25
  $region24: #{mlp_forward.1} parent=0 // pred_region
    _
  $region25: #{mlp_forward.1} parent=0 // pred_fallthru
    _
  // Predicated region
  $region26: #{mlp_forward.1} parent=0 // pred_check
    _
  $region27: #{mlp_forward.1} parent=0 // pred_check_branch
    %26 = sbr.rel (0) target = $region29
  $region28: #{mlp_forward.1} parent=0 // pred_region
    _
  $region29: #{mlp_forward.1} parent=0 // pred_fallthru
    _
  %v28 = vld [vmem:[%s0] sm:$0xff]
  %v29 = vld [vmem:[%s0 + $0x8] sm:$0xff]
  %v30 = vld [vmem:[%s0 + $0x10] sm:$0xff]
  %v31 = vld [vmem:[%s0 + $0x18] sm:$0xff]
  %v32 = vld [vmem:[%s0 + $0x20] sm:$0xff]
  %v33 = vld [vmem:[%s0 + $0x28] sm:$0xff]
  %v34 = vld [vmem:[%s0 + $0x30] sm:$0xff]
  %v35 = vld [vmem:[%s0 + $0x38] sm:$0xff]
  %v36 = vld [vmem:[%s0 + $0x40] sm:$0xff]
  %v37 = vld [vmem:[%s0 + $0x48] sm:$0xff]
  %v38 = vld [vmem:[%s0 + $0x50] sm:$0xff]
  %v39 = vld [vmem:[%s0 + $0x58] sm:$0xff]
  %v40 = vld [vmem:[%s0 + $0x60] sm:$0xff]
  %v41 = vld [vmem:[%s0 + $0x68] sm:$0xff]
  %v42 = vld [vmem:[%s0 + $0x70] sm:$0xff]
  %v43 = vld [vmem:[%s0 + $0x78] sm:$0xff]
  %v44 = vpack.c.bf16 %v29, %v28
  %v45 = vpack.c.bf16 %v31, %v30
  %v46 = vpack.c.bf16 %v33, %v32
  %v47 = vpack.c.bf16 %v35, %v34
  %v48 = vpack.c.bf16 %v37, %v36
  %v49 = vpack.c.bf16 %v39, %v38
  %v50 = vpack.c.bf16 %v41, %v40
  %v51 = vpack.c.bf16 %v43, %v42
  %v52 = vld [vmem:[%s1] sm:$0xf]
  %v53 = vld [vmem:[%s1 + $0x4] sm:$0xf]
  %v54 = vld [vmem:[%s1 + $0x8] sm:$0xf]
  %v55 = vld [vmem:[%s1 + $0xc] sm:$0xf]
  %v56 = vld [vmem:[%s1 + $0x10] sm:$0xf]
  %v57 = vld [vmem:[%s1 + $0x14] sm:$0xf]
  %v58 = vld [vmem:[%s1 + $0x18] sm:$0xf]
  %v59 = vld [vmem:[%s1 + $0x1c] sm:$0xf]
  %v60 = vld [vmem:[%s2] sm:$0xff]
  %v61 = vld [vmem:[%s2 + $0x8] sm:$0xff]
  %v62 = vld [vmem:[%s2 + $0x10] sm:$0xff]
  %v63 = vld [vmem:[%s2 + $0x18] sm:$0xff]
  %v64 = vld [vmem:[%s2 + $0x20] sm:$0xff]
  %v65 = vld [vmem:[%s2 + $0x28] sm:$0xff]
  %v66 = vld [vmem:[%s2 + $0x30] sm:$0xff]
  %v67 = vld [vmem:[%s2 + $0x38] sm:$0xff]
  %69 = vset.pattern.permute.xlu0 0
  %70 = vperm.xlu0 %69, %v60
  %v71 = vpop.permute.xlu0 %70
  %74 = vset.pattern.permute.xlu0 0
  %75 = vperm.xlu0 %74, %v61
  %v76 = vpop.permute.xlu0 %75
  %79 = vset.pattern.permute.xlu0 0
  %80 = vperm.xlu0 %79, %v62
  %v81 = vpop.permute.xlu0 %80
  %84 = vset.pattern.permute.xlu0 0
  %85 = vperm.xlu0 %84, %v63
  %v86 = vpop.permute.xlu0 %85
  %89 = vset.pattern.permute.xlu0 0
  %90 = vperm.xlu0 %89, %v64
  %v91 = vpop.permute.xlu0 %90
  %94 = vset.pattern.permute.xlu0 0
  %95 = vperm.xlu0 %94, %v65
  %v96 = vpop.permute.xlu0 %95
  %99 = vset.pattern.permute.xlu0 0
  %100 = vperm.xlu0 %99, %v66
  %v101 = vpop.permute.xlu0 %100
  %104 = vset.pattern.permute.xlu0 0
  %105 = vperm.xlu0 %104, %v67
  %v106 = vpop.permute.xlu0 %105
  %v116 = vunpack.c.l.b16 %v52
  %v117 = vunpack.c.l.b16 %v53
  %v118 = vunpack.c.l.b16 %v54
  %v119 = vunpack.c.l.b16 %v55
  %v120 = vunpack.c.l.b16 %v56
  %v121 = vunpack.c.l.b16 %v57
  %v122 = vunpack.c.l.b16 %v58
  %v123 = vunpack.c.l.b16 %v59
  %v124 = vpack.c.b16 %v117, %v116
  %v125 = vpack.c.b16 %v119, %v118
  %v126 = vpack.c.b16 %v121, %v120
  %v127 = vpack.c.b16 %v123, %v122
  %vm128 = vcmask 130048
  %v130 = vsel %vm128, %v124, 0
  %v133 = vsel %vm128, %v125, 0
  %v136 = vsel %vm128, %v126, 0
  %v139 = vsel %vm128, %v127, 0
  %v142 = vsel %vm128, %v44, 0
  %v145 = vsel %vm128, %v45, 0
  %v148 = vsel %vm128, %v46, 0
  %v151 = vsel %vm128, %v47, 0
  %v154 = vsel %vm128, %v48, 0
  %v157 = vsel %vm128, %v49, 0
  %v160 = vsel %vm128, %v50, 0
  %v163 = vsel %vm128, %v51, 0
  %165 = vmatpush.bf16.xpose.msra.mxu0 %v163
  %166 = vmatpush.bf16.xpose.msra.mxu0 %v160
  %167 = vmatpush.bf16.xpose.msra.mxu0 %v157
  %168 = vmatpush.bf16.xpose.msra.mxu0 %v154
  %169 = vmatpush.bf16.xpose.msra.mxu0 %v151
  %170 = vmatpush.bf16.xpose.msra.mxu0 %v148
  %171 = vmatpush.bf16.xpose.msra.mxu0 %v145
  %172 = vmatpush.bf16.xpose.msra.mxu0 %v142
  %173 = vmatmul.bf16.gmra.mxu0 %v130
  %v174 = vpop.f32.mrf.mxu0
  %v175 = vadd.f32 %v71, %v174
  %v176 = vpop.f32.mrf.mxu0
  %v177 = vadd.f32 %v76, %v176
  %178 = vmatmul.bf16.gmra.mxu0 %v133
  %v179 = vpop.f32.mrf.mxu0
  %v180 = vadd.f32 %v81, %v179
  %v181 = vpop.f32.mrf.mxu0
  %v182 = vadd.f32 %v86, %v181
  %183 = vmatmul.bf16.gmra.mxu0 %v136
  %v184 = vpop.f32.mrf.mxu0
  %v185 = vadd.f32 %v91, %v184
  %v186 = vpop.f32.mrf.mxu0
  %v187 = vadd.f32 %v96, %v186
  %188 = vmatmul.bf16.gmra.mxu0 %v139
  %v189 = vpop.f32.mrf.mxu0
  %v190 = vadd.f32 %v101, %v189
  %v191 = vpop.f32.mrf.mxu0
  %v192 = vadd.f32 %v106, %v191
  %193 = vdwg.mxu0
  %v194 = vpack.c.bf16 %v177, %v175
  %v195 = vpack.c.bf16 %v182, %v180
  %v196 = vpack.c.bf16 %v187, %v185
  %v197 = vpack.c.bf16 %v192, %v190
  %v198 = vld [vmem:[%s3] sm:$0xf]
  %v199 = vld [vmem:[%s3 + $0x4] sm:$0xf]
  %v200 = vld [vmem:[%s3 + $0x8] sm:$0xf]
  %v201 = vld [vmem:[%s3 + $0xc] sm:$0xf]
  %v202 = vld [vmem:[%s3 + $0x10] sm:$0xf]
  %v203 = vld [vmem:[%s3 + $0x14] sm:$0xf]
  %v204 = vld [vmem:[%s3 + $0x18] sm:$0xf]
  %v205 = vld [vmem:[%s3 + $0x1c] sm:$0xf]
  %v206 = vld [vmem:[%s4] sm:$0xff]
  %v207 = vld [vmem:[%s4 + $0x8] sm:$0xff]
  %v208 = vld [vmem:[%s4 + $0x10] sm:$0xff]
  %v209 = vld [vmem:[%s4 + $0x18] sm:$0xff]
  %v210 = vld [vmem:[%s4 + $0x20] sm:$0xff]
  %v211 = vld [vmem:[%s4 + $0x28] sm:$0xff]
  %v212 = vld [vmem:[%s4 + $0x30] sm:$0xff]
  %v213 = vld [vmem:[%s4 + $0x38] sm:$0xff]
  %215 = vset.pattern.permute.xlu0 0
  %216 = vperm.xlu0 %215, %v206
  %v217 = vpop.permute.xlu0 %216
  %220 = vset.pattern.permute.xlu0 0
  %221 = vperm.xlu0 %220, %v207
  %v222 = vpop.permute.xlu0 %221
  %225 = vset.pattern.permute.xlu0 0
  %226 = vperm.xlu0 %225, %v208
  %v227 = vpop.permute.xlu0 %226
  %230 = vset.pattern.permute.xlu0 0
  %231 = vperm.xlu0 %230, %v209
  %v232 = vpop.permute.xlu0 %231
  %235 = vset.pattern.permute.xlu0 0
  %236 = vperm.xlu0 %235, %v210
  %v237 = vpop.permute.xlu0 %236
  %240 = vset.pattern.permute.xlu0 0
  %241 = vperm.xlu0 %240, %v211
  %v242 = vpop.permute.xlu0 %241
  %245 = vset.pattern.permute.xlu0 0
  %246 = vperm.xlu0 %245, %v212
  %v247 = vpop.permute.xlu0 %246
  %250 = vset.pattern.permute.xlu0 0
  %251 = vperm.xlu0 %250, %v213
  %v252 = vpop.permute.xlu0 %251
  %v262 = vunpack.c.l.b16 %v198
  %v263 = vunpack.c.l.b16 %v199
  %v264 = vunpack.c.l.b16 %v200
  %v265 = vunpack.c.l.b16 %v201
  %v266 = vunpack.c.l.b16 %v202
  %v267 = vunpack.c.l.b16 %v203
  %v268 = vunpack.c.l.b16 %v204
  %v269 = vunpack.c.l.b16 %v205
  %v270 = vpack.c.b16 %v263, %v262
  %v271 = vpack.c.b16 %v265, %v264
  %v272 = vpack.c.b16 %v267, %v266
  %v273 = vpack.c.b16 %v269, %v268
  %vm274 = vcmask 523264
  %v276 = vsel %vm274, %v270, 0
  %v279 = vsel %vm274, %v271, 0
  %v282 = vsel %vm274, %v272, 0
  %v285 = vsel %vm274, %v273, 0
  %287 = vmatpush.bf16.msra.mxu0 0
  %288 = vmatpush.bf16.msra.mxu0 0
  %289 = vmatpush.bf16.msra.mxu0 0
  %290 = vmatpush.bf16.msra.mxu0 0
  %291 = vmatpush.bf16.msra.mxu0 %v197
  %292 = vmatpush.bf16.msra.mxu0 %v196
  %293 = vmatpush.bf16.msra.mxu0 %v195
  %294 = vmatpush.bf16.msra.mxu0 %v194
  %295 = vmatmul.bf16.gmra.mxu0 %v276
  %v296 = vpop.f32.mrf.mxu0
  %v297 = vadd.f32 %v217, %v296
  %v298 = vpop.f32.mrf.mxu0
  %v299 = vadd.f32 %v222, %v298
  %300 = vmatmul.bf16.gmra.mxu0 %v279
  %v301 = vpop.f32.mrf.mxu0
  %v302 = vadd.f32 %v227, %v301
  %v303 = vpop.f32.mrf.mxu0
  %v304 = vadd.f32 %v232, %v303
  %305 = vmatmul.bf16.gmra.mxu0 %v282
  %v306 = vpop.f32.mrf.mxu0
  %v307 = vadd.f32 %v237, %v306
  %v308 = vpop.f32.mrf.mxu0
  %v309 = vadd.f32 %v242, %v308
  %310 = vmatmul.bf16.gmra.mxu0 %v285
  %v311 = vpop.f32.mrf.mxu0
  %v312 = vadd.f32 %v247, %v311
  %v313 = vpop.f32.mrf.mxu0
  %v314 = vadd.f32 %v252, %v313
  %315 = vdwg.mxu0
  %v316 = vpack.c.bf16 %v297, %v297
  %v317 = vpack.c.bf16 %v299, %v299
  %v318 = vpack.c.bf16 %v302, %v302
  %v319 = vpack.c.bf16 %v304, %v304
  %v320 = vpack.c.bf16 %v307, %v307
  %v321 = vpack.c.bf16 %v309, %v309
  %v322 = vpack.c.bf16 %v312, %v312
  %v323 = vpack.c.bf16 %v314, %v314
  %v324 = vunpack.c.l.bf16 %v316
  %v325 = vunpack.c.l.bf16 %v317
  %v326 = vunpack.c.l.bf16 %v318
  %v327 = vunpack.c.l.bf16 %v319
  %v328 = vunpack.c.l.bf16 %v320
  %v329 = vunpack.c.l.bf16 %v321
  %v330 = vunpack.c.l.bf16 %v322
  %v331 = vunpack.c.l.bf16 %v323
  %v332 = vmax.f32 %v324, 0.0
  %v333 = vmax.f32 %v325, 0.0
  %v334 = vmax.f32 %v326, 0.0
  %v335 = vmax.f32 %v327, 0.0
  %v336 = vmax.f32 %v328, 0.0
  %v337 = vmax.f32 %v329, 0.0
  %v338 = vmax.f32 %v330, 0.0
  %v339 = vmax.f32 %v331, 0.0
  %v340 = vpack.c.bf16 %v333, %v332
  %v341 = vpack.c.bf16 %v335, %v334
  %v342 = vpack.c.bf16 %v337, %v336
  %v343 = vpack.c.bf16 %v339, %v338
  %s344 = scalar_lea.vmem %s3, 32
  %v345 = vld [vmem:[%s344] sm:$0xf]
  %v346 = vld [vmem:[%s344 + $0x4] sm:$0xf]
  %v347 = vld [vmem:[%s344 + $0x8] sm:$0xf]
  %v348 = vld [vmem:[%s344 + $0xc] sm:$0xf]
  %v349 = vld [vmem:[%s344 + $0x10] sm:$0xf]
  %v350 = vld [vmem:[%s344 + $0x14] sm:$0xf]
  %v351 = vld [vmem:[%s344 + $0x18] sm:$0xf]
  %v352 = vld [vmem:[%s344 + $0x1c] sm:$0xf]
  %s353 = scalar_lea.vmem %s4, 64
  %v354 = vld [vmem:[%s353] sm:$0xff]
  %v355 = vld [vmem:[%s353 + $0x8] sm:$0xff]
  %v356 = vld [vmem:[%s353 + $0x10] sm:$0xff]
  %v357 = vld [vmem:[%s353 + $0x18] sm:$0xff]
  %v358 = vld [vmem:[%s353 + $0x20] sm:$0xff]
  %v359 = vld [vmem:[%s353 + $0x28] sm:$0xff]
  %v360 = vld [vmem:[%s353 + $0x30] sm:$0xff]
  %v361 = vld [vmem:[%s353 + $0x38] sm:$0xff]
  %363 = vset.pattern.permute.xlu0 0
  %364 = vperm.xlu0 %363, %v354
  %v365 = vpop.permute.xlu0 %364
  %368 = vset.pattern.permute.xlu0 0
  %369 = vperm.xlu0 %368, %v355
  %v370 = vpop.permute.xlu0 %369
  %373 = vset.pattern.permute.xlu0 0
  %374 = vperm.xlu0 %373, %v356
  %v375 = vpop.permute.xlu0 %374
  %378 = vset.pattern.permute.xlu0 0
  %379 = vperm.xlu0 %378, %v357
  %v380 = vpop.permute.xlu0 %379
  %383 = vset.pattern.permute.xlu0 0
  %384 = vperm.xlu0 %383, %v358
  %v385 = vpop.permute.xlu0 %384
  %388 = vset.pattern.permute.xlu0 0
  %389 = vperm.xlu0 %388, %v359
  %v390 = vpop.permute.xlu0 %389
  %393 = vset.pattern.permute.xlu0 0
  %394 = vperm.xlu0 %393, %v360
  %v395 = vpop.permute.xlu0 %394
  %398 = vset.pattern.permute.xlu0 0
  %399 = vperm.xlu0 %398, %v361
  %v400 = vpop.permute.xlu0 %399
  %v410 = vunpack.c.l.b16 %v345
  %v411 = vunpack.c.l.b16 %v346
  %v412 = vunpack.c.l.b16 %v347
  %v413 = vunpack.c.l.b16 %v348
  %v414 = vunpack.c.l.b16 %v349
  %v415 = vunpack.c.l.b16 %v350
  %v416 = vunpack.c.l.b16 %v351
  %v417 = vunpack.c.l.b16 %v352
  %v418 = vpack.c.b16 %v411, %v410
  %v419 = vpack.c.b16 %v413, %v412
  %v420 = vpack.c.b16 %v415, %v414
  %v421 = vpack.c.b16 %v417, %v416
  %v423 = vsel %vm274, %v418, 0
  %v426 = vsel %vm274, %v419, 0
  %v429 = vsel %vm274, %v420, 0
  %v432 = vsel %vm274, %v421, 0
  %434 = vmatpush.bf16.msra.mxu0 0
  %435 = vmatpush.bf16.msra.mxu0 0
  %436 = vmatpush.bf16.msra.mxu0 0
  %437 = vmatpush.bf16.msra.mxu0 0
  %438 = vmatpush.bf16.msra.mxu0 %v343
  %439 = vmatpush.bf16.msra.mxu0 %v342
  %440 = vmatpush.bf16.msra.mxu0 %v341
  %441 = vmatpush.bf16.msra.mxu0 %v340
  %442 = vmatmul.bf16.gmra.mxu0 %v423
  %v443 = vpop.f32.mrf.mxu0
  %v444 = vadd.f32 %v365, %v443
  %v445 = vpop.f32.mrf.mxu0
  %v446 = vadd.f32 %v370, %v445
  %447 = vmatmul.bf16.gmra.mxu0 %v426
  %v448 = vpop.f32.mrf.mxu0
  %v449 = vadd.f32 %v375, %v448
  %v450 = vpop.f32.mrf.mxu0
  %v451 = vadd.f32 %v380, %v450
  %452 = vmatmul.bf16.gmra.mxu0 %v429
  %v453 = vpop.f32.mrf.mxu0
  %v454 = vadd.f32 %v385, %v453
  %v455 = vpop.f32.mrf.mxu0
  %v456 = vadd.f32 %v390, %v455
  %457 = vmatmul.bf16.gmra.mxu0 %v432
  %v458 = vpop.f32.mrf.mxu0
  %v459 = vadd.f32 %v395, %v458
  %v460 = vpop.f32.mrf.mxu0
  %v461 = vadd.f32 %v400, %v460
  %462 = vdwg.mxu0
  %v463 = vpack.c.bf16 %v444, %v444
  %v464 = vpack.c.bf16 %v446, %v446
  %v465 = vpack.c.bf16 %v449, %v449
  %v466 = vpack.c.bf16 %v451, %v451
  %v467 = vpack.c.bf16 %v454, %v454
  %v468 = vpack.c.bf16 %v456, %v456
  %v469 = vpack.c.bf16 %v459, %v459
  %v470 = vpack.c.bf16 %v461, %v461
  %v471 = vunpack.c.l.bf16 %v463
  %v472 = vunpack.c.l.bf16 %v464
  %v473 = vunpack.c.l.bf16 %v465
  %v474 = vunpack.c.l.bf16 %v466
  %v475 = vunpack.c.l.bf16 %v467
  %v476 = vunpack.c.l.bf16 %v468
  %v477 = vunpack.c.l.bf16 %v469
  %v478 = vunpack.c.l.bf16 %v470
  %v479 = vmax.f32 %v471, 0.0
  %v480 = vmax.f32 %v472, 0.0
  %v481 = vmax.f32 %v473, 0.0
  %v482 = vmax.f32 %v474, 0.0
  %v483 = vmax.f32 %v475, 0.0
  %v484 = vmax.f32 %v476, 0.0
  %v485 = vmax.f32 %v477, 0.0
  %v486 = vmax.f32 %v478, 0.0
  %v487 = vpack.c.bf16 %v480, %v479
  %v488 = vpack.c.bf16 %v482, %v481
  %v489 = vpack.c.bf16 %v484, %v483
  %v490 = vpack.c.bf16 %v486, %v485
  %s491 = scalar_lea.vmem %s3, 64
  %v492 = vld [vmem:[%s491] sm:$0xf]
  %v493 = vld [vmem:[%s491 + $0x4] sm:$0xf]
  %v494 = vld [vmem:[%s491 + $0x8] sm:$0xf]
  %v495 = vld [vmem:[%s491 + $0xc] sm:$0xf]
  %v496 = vld [vmem:[%s491 + $0x10] sm:$0xf]
  %v497 = vld [vmem:[%s491 + $0x14] sm:$0xf]
  %v498 = vld [vmem:[%s491 + $0x18] sm:$0xf]
  %v499 = vld [vmem:[%s491 + $0x1c] sm:$0xf]
  %s500 = scalar_lea.vmem %s4, 128
  %v501 = vld [vmem:[%s500] sm:$0xff]
  %v502 = vld [vmem:[%s500 + $0x8] sm:$0xff]
  %v503 = vld [vmem:[%s500 + $0x10] sm:$0xff]
  %v504 = vld [vmem:[%s500 + $0x18] sm:$0xff]
  %v505 = vld [vmem:[%s500 + $0x20] sm:$0xff]
  %v506 = vld [vmem:[%s500 + $0x28] sm:$0xff]
  %v507 = vld [vmem:[%s500 + $0x30] sm:$0xff]
  %v508 = vld [vmem:[%s500 + $0x38] sm:$0xff]
  %510 = vset.pattern.permute.xlu0 0
  %511 = vperm.xlu0 %510, %v501
  %v512 = vpop.permute.xlu0 %511
  %515 = vset.pattern.permute.xlu0 0
  %516 = vperm.xlu0 %515, %v502
  %v517 = vpop.permute.xlu0 %516
  %520 = vset.pattern.permute.xlu0 0
  %521 = vperm.xlu0 %520, %v503
  %v522 = vpop.permute.xlu0 %521
  %525 = vset.pattern.permute.xlu0 0
  %526 = vperm.xlu0 %525, %v504
  %v527 = vpop.permute.xlu0 %526
  %530 = vset.pattern.permute.xlu0 0
  %531 = vperm.xlu0 %530, %v505
  %v532 = vpop.permute.xlu0 %531
  %535 = vset.pattern.permute.xlu0 0
  %536 = vperm.xlu0 %535, %v506
  %v537 = vpop.permute.xlu0 %536
  %540 = vset.pattern.permute.xlu0 0
  %541 = vperm.xlu0 %540, %v507
  %v542 = vpop.permute.xlu0 %541
  %545 = vset.pattern.permute.xlu0 0
  %546 = vperm.xlu0 %545, %v508
  %v547 = vpop.permute.xlu0 %546
  %v557 = vunpack.c.l.b16 %v492
  %v558 = vunpack.c.l.b16 %v493
  %v559 = vunpack.c.l.b16 %v494
  %v560 = vunpack.c.l.b16 %v495
  %v561 = vunpack.c.l.b16 %v496
  %v562 = vunpack.c.l.b16 %v497
  %v563 = vunpack.c.l.b16 %v498
  %v564 = vunpack.c.l.b16 %v499
  %v565 = vpack.c.b16 %v558, %v557
  %v566 = vpack.c.b16 %v560, %v559
  %v567 = vpack.c.b16 %v562, %v561
  %v568 = vpack.c.b16 %v564, %v563
  %v570 = vsel %vm274, %v565, 0
  %v573 = vsel %vm274, %v566, 0
  %v576 = vsel %vm274, %v567, 0
  %v579 = vsel %vm274, %v568, 0
  %581 = vmatpush.bf16.msra.mxu0 0
  %582 = vmatpush.bf16.msra.mxu0 0
  %583 = vmatpush.bf16.msra.mxu0 0
  %584 = vmatpush.bf16.msra.mxu0 0
  %585 = vmatpush.bf16.msra.mxu0 %v490
  %586 = vmatpush.bf16.msra.mxu0 %v489
  %587 = vmatpush.bf16.msra.mxu0 %v488
  %588 = vmatpush.bf16.msra.mxu0 %v487
  %589 = vmatmul.bf16.gmra.mxu0 %v570
  %v590 = vpop.f32.mrf.mxu0
  %v591 = vadd.f32 %v512, %v590
  %v592 = vpop.f32.mrf.mxu0
  %v593 = vadd.f32 %v517, %v592
  %594 = vmatmul.bf16.gmra.mxu0 %v573
  %v595 = vpop.f32.mrf.mxu0
  %v596 = vadd.f32 %v522, %v595
  %v597 = vpop.f32.mrf.mxu0
  %v598 = vadd.f32 %v527, %v597
  %599 = vmatmul.bf16.gmra.mxu0 %v576
  %v600 = vpop.f32.mrf.mxu0
  %v601 = vadd.f32 %v532, %v600
  %v602 = vpop.f32.mrf.mxu0
  %v603 = vadd.f32 %v537, %v602
  %604 = vmatmul.bf16.gmra.mxu0 %v579
  %v605 = vpop.f32.mrf.mxu0
  %v606 = vadd.f32 %v542, %v605
  %v607 = vpop.f32.mrf.mxu0
  %v608 = vadd.f32 %v547, %v607
  %609 = vdwg.mxu0
  %v610 = vpack.c.bf16 %v591, %v591
  %v611 = vpack.c.bf16 %v593, %v593
  %v612 = vpack.c.bf16 %v596, %v596
  %v613 = vpack.c.bf16 %v598, %v598
  %v614 = vpack.c.bf16 %v601, %v601
  %v615 = vpack.c.bf16 %v603, %v603
  %v616 = vpack.c.bf16 %v606, %v606
  %v617 = vpack.c.bf16 %v608, %v608
  %v618 = vunpack.c.l.bf16 %v610
  %v619 = vunpack.c.l.bf16 %v611
  %v620 = vunpack.c.l.bf16 %v612
  %v621 = vunpack.c.l.bf16 %v613
  %v622 = vunpack.c.l.bf16 %v614
  %v623 = vunpack.c.l.bf16 %v615
  %v624 = vunpack.c.l.bf16 %v616
  %v625 = vunpack.c.l.bf16 %v617
  %v626 = vmax.f32 %v618, 0.0
  %v627 = vmax.f32 %v619, 0.0
  %v628 = vmax.f32 %v620, 0.0
  %v629 = vmax.f32 %v621, 0.0
  %v630 = vmax.f32 %v622, 0.0
  %v631 = vmax.f32 %v623, 0.0
  %v632 = vmax.f32 %v624, 0.0
  %v633 = vmax.f32 %v625, 0.0
  %v634 = vpack.c.bf16 %v627, %v626
  %v635 = vpack.c.bf16 %v629, %v628
  %v636 = vpack.c.bf16 %v631, %v630
  %v637 = vpack.c.bf16 %v633, %v632
  %s638 = scalar_lea.vmem %s3, 96
  %v639 = vld [vmem:[%s638] sm:$0xf]
  %v640 = vld [vmem:[%s638 + $0x4] sm:$0xf]
  %v641 = vld [vmem:[%s638 + $0x8] sm:$0xf]
  %v642 = vld [vmem:[%s638 + $0xc] sm:$0xf]
  %v643 = vld [vmem:[%s638 + $0x10] sm:$0xf]
  %v644 = vld [vmem:[%s638 + $0x14] sm:$0xf]
  %v645 = vld [vmem:[%s638 + $0x18] sm:$0xf]
  %v646 = vld [vmem:[%s638 + $0x1c] sm:$0xf]
  %s647 = scalar_lea.vmem %s4, 192
  %v648 = vld [vmem:[%s647] sm:$0xff]
  %v649 = vld [vmem:[%s647 + $0x8] sm:$0xff]
  %v650 = vld [vmem:[%s647 + $0x10] sm:$0xff]
  %v651 = vld [vmem:[%s647 + $0x18] sm:$0xff]
  %v652 = vld [vmem:[%s647 + $0x20] sm:$0xff]
  %v653 = vld [vmem:[%s647 + $0x28] sm:$0xff]
  %v654 = vld [vmem:[%s647 + $0x30] sm:$0xff]
  %v655 = vld [vmem:[%s647 + $0x38] sm:$0xff]
  %657 = vset.pattern.permute.xlu0 0
  %658 = vperm.xlu0 %657, %v648
  %v659 = vpop.permute.xlu0 %658
  %662 = vset.pattern.permute.xlu0 0
  %663 = vperm.xlu0 %662, %v649
  %v664 = vpop.permute.xlu0 %663
  %667 = vset.pattern.permute.xlu0 0
  %668 = vperm.xlu0 %667, %v650
  %v669 = vpop.permute.xlu0 %668
  %672 = vset.pattern.permute.xlu0 0
  %673 = vperm.xlu0 %672, %v651
  %v674 = vpop.permute.xlu0 %673
  %677 = vset.pattern.permute.xlu0 0
  %678 = vperm.xlu0 %677, %v652
  %v679 = vpop.permute.xlu0 %678
  %682 = vset.pattern.permute.xlu0 0
  %683 = vperm.xlu0 %682, %v653
  %v684 = vpop.permute.xlu0 %683
  %687 = vset.pattern.permute.xlu0 0
  %688 = vperm.xlu0 %687, %v654
  %v689 = vpop.permute.xlu0 %688
  %692 = vset.pattern.permute.xlu0 0
  %693 = vperm.xlu0 %692, %v655
  %v694 = vpop.permute.xlu0 %693
  %v704 = vunpack.c.l.b16 %v639
  %v705 = vunpack.c.l.b16 %v640
  %v706 = vunpack.c.l.b16 %v641
  %v707 = vunpack.c.l.b16 %v642
  %v708 = vunpack.c.l.b16 %v643
  %v709 = vunpack.c.l.b16 %v644
  %v710 = vunpack.c.l.b16 %v645
  %v711 = vunpack.c.l.b16 %v646
  %v712 = vpack.c.b16 %v705, %v704
  %v713 = vpack.c.b16 %v707, %v706
  %v714 = vpack.c.b16 %v709, %v708
  %v715 = vpack.c.b16 %v711, %v710
  %v717 = vsel %vm274, %v712, 0
  %v720 = vsel %vm274, %v713, 0
  %v723 = vsel %vm274, %v714, 0
  %v726 = vsel %vm274, %v715, 0
  %728 = vmatpush.bf16.msra.mxu0 0
  %729 = vmatpush.bf16.msra.mxu0 0
  %730 = vmatpush.bf16.msra.mxu0 0
  %731 = vmatpush.bf16.msra.mxu0 0
  %732 = vmatpush.bf16.msra.mxu0 %v637
  %733 = vmatpush.bf16.msra.mxu0 %v636
  %734 = vmatpush.bf16.msra.mxu0 %v635
  %735 = vmatpush.bf16.msra.mxu0 %v634
  %736 = vmatmul.bf16.gmra.mxu0 %v717
  %v737 = vpop.f32.mrf.mxu0
  %v738 = vadd.f32 %v659, %v737
  %v739 = vpop.f32.mrf.mxu0
  %v740 = vadd.f32 %v664, %v739
  %741 = vmatmul.bf16.gmra.mxu0 %v720
  %v742 = vpop.f32.mrf.mxu0
  %v743 = vadd.f32 %v669, %v742
  %v744 = vpop.f32.mrf.mxu0
  %v745 = vadd.f32 %v674, %v744
  %746 = vmatmul.bf16.gmra.mxu0 %v723
  %v747 = vpop.f32.mrf.mxu0
  %v748 = vadd.f32 %v679, %v747
  %v749 = vpop.f32.mrf.mxu0
  %v750 = vadd.f32 %v684, %v749
  %751 = vmatmul.bf16.gmra.mxu0 %v726
  %v752 = vpop.f32.mrf.mxu0
  %v753 = vadd.f32 %v689, %v752
  %v754 = vpop.f32.mrf.mxu0
  %v755 = vadd.f32 %v694, %v754
  %756 = vdwg.mxu0
  %v757 = vpack.c.bf16 %v738, %v738
  %v758 = vpack.c.bf16 %v740, %v740
  %v759 = vpack.c.bf16 %v743, %v743
  %v760 = vpack.c.bf16 %v745, %v745
  %v761 = vpack.c.bf16 %v748, %v748
  %v762 = vpack.c.bf16 %v750, %v750
  %v763 = vpack.c.bf16 %v753, %v753
  %v764 = vpack.c.bf16 %v755, %v755
  %v765 = vunpack.c.l.bf16 %v757
  %v766 = vunpack.c.l.bf16 %v758
  %v767 = vunpack.c.l.bf16 %v759
  %v768 = vunpack.c.l.bf16 %v760
  %v769 = vunpack.c.l.bf16 %v761
  %v770 = vunpack.c.l.bf16 %v762
  %v771 = vunpack.c.l.bf16 %v763
  %v772 = vunpack.c.l.bf16 %v764
  %v773 = vmax.f32 %v765, 0.0
  %v774 = vmax.f32 %v766, 0.0
  %v775 = vmax.f32 %v767, 0.0
  %v776 = vmax.f32 %v768, 0.0
  %v777 = vmax.f32 %v769, 0.0
  %v778 = vmax.f32 %v770, 0.0
  %v779 = vmax.f32 %v771, 0.0
  %v780 = vmax.f32 %v772, 0.0
  %v781 = vpack.c.bf16 %v774, %v773
  %v782 = vpack.c.bf16 %v776, %v775
  %v783 = vpack.c.bf16 %v778, %v777
  %v784 = vpack.c.bf16 %v780, %v779
  %s785 = scalar_lea.vmem %s3, 128
  %v786 = vld [vmem:[%s785] sm:$0xf]
  %v787 = vld [vmem:[%s785 + $0x4] sm:$0xf]
  %v788 = vld [vmem:[%s785 + $0x8] sm:$0xf]
  %v789 = vld [vmem:[%s785 + $0xc] sm:$0xf]
  %v790 = vld [vmem:[%s785 + $0x10] sm:$0xf]
  %v791 = vld [vmem:[%s785 + $0x14] sm:$0xf]
  %v792 = vld [vmem:[%s785 + $0x18] sm:$0xf]
  %v793 = vld [vmem:[%s785 + $0x1c] sm:$0xf]
  %s794 = scalar_lea.vmem %s4, 256
  %v795 = vld [vmem:[%s794] sm:$0xff]
  %v796 = vld [vmem:[%s794 + $0x8] sm:$0xff]
  %v797 = vld [vmem:[%s794 + $0x10] sm:$0xff]
  %v798 = vld [vmem:[%s794 + $0x18] sm:$0xff]
  %v799 = vld [vmem:[%s794 + $0x20] sm:$0xff]
  %v800 = vld [vmem:[%s794 + $0x28] sm:$0xff]
  %v801 = vld [vmem:[%s794 + $0x30] sm:$0xff]
  %v802 = vld [vmem:[%s794 + $0x38] sm:$0xff]
  %804 = vset.pattern.permute.xlu0 0
  %805 = vperm.xlu0 %804, %v795
  %v806 = vpop.permute.xlu0 %805
  %809 = vset.pattern.permute.xlu0 0
  %810 = vperm.xlu0 %809, %v796
  %v811 = vpop.permute.xlu0 %810
  %814 = vset.pattern.permute.xlu0 0
  %815 = vperm.xlu0 %814, %v797
  %v816 = vpop.permute.xlu0 %815
  %819 = vset.pattern.permute.xlu0 0
  %820 = vperm.xlu0 %819, %v798
  %v821 = vpop.permute.xlu0 %820
  %824 = vset.pattern.permute.xlu0 0
  %825 = vperm.xlu0 %824, %v799
  %v826 = vpop.permute.xlu0 %825
  %829 = vset.pattern.permute.xlu0 0
  %830 = vperm.xlu0 %829, %v800
  %v831 = vpop.permute.xlu0 %830
  %834 = vset.pattern.permute.xlu0 0
  %835 = vperm.xlu0 %834, %v801
  %v836 = vpop.permute.xlu0 %835
  %839 = vset.pattern.permute.xlu0 0
  %840 = vperm.xlu0 %839, %v802
  %v841 = vpop.permute.xlu0 %840
  %v851 = vunpack.c.l.b16 %v786
  %v852 = vunpack.c.l.b16 %v787
  %v853 = vunpack.c.l.b16 %v788
  %v854 = vunpack.c.l.b16 %v789
  %v855 = vunpack.c.l.b16 %v790
  %v856 = vunpack.c.l.b16 %v791
  %v857 = vunpack.c.l.b16 %v792
  %v858 = vunpack.c.l.b16 %v793
  %v859 = vpack.c.b16 %v852, %v851
  %v860 = vpack.c.b16 %v854, %v853
  %v861 = vpack.c.b16 %v856, %v855
  %v862 = vpack.c.b16 %v858, %v857
  %v864 = vsel %vm274, %v859, 0
  %v867 = vsel %vm274, %v860, 0
  %v870 = vsel %vm274, %v861, 0
  %v873 = vsel %vm274, %v862, 0
  %875 = vmatpush.bf16.msra.mxu0 0
  %876 = vmatpush.bf16.msra.mxu0 0
  %877 = vmatpush.bf16.msra.mxu0 0
  %878 = vmatpush.bf16.msra.mxu0 0
  %879 = vmatpush.bf16.msra.mxu0 %v784
  %880 = vmatpush.bf16.msra.mxu0 %v783
  %881 = vmatpush.bf16.msra.mxu0 %v782
  %882 = vmatpush.bf16.msra.mxu0 %v781
  %883 = vmatmul.bf16.gmra.mxu0 %v864
  %v884 = vpop.f32.mrf.mxu0
  %v885 = vadd.f32 %v806, %v884
  %v886 = vpop.f32.mrf.mxu0
  %v887 = vadd.f32 %v811, %v886
  %888 = vmatmul.bf16.gmra.mxu0 %v867
  %v889 = vpop.f32.mrf.mxu0
  %v890 = vadd.f32 %v816, %v889
  %v891 = vpop.f32.mrf.mxu0
  %v892 = vadd.f32 %v821, %v891
  %893 = vmatmul.bf16.gmra.mxu0 %v870
  %v894 = vpop.f32.mrf.mxu0
  %v895 = vadd.f32 %v826, %v894
  %v896 = vpop.f32.mrf.mxu0
  %v897 = vadd.f32 %v831, %v896
  %898 = vmatmul.bf16.gmra.mxu0 %v873
  %v899 = vpop.f32.mrf.mxu0
  %v900 = vadd.f32 %v836, %v899
  %v901 = vpop.f32.mrf.mxu0
  %v902 = vadd.f32 %v841, %v901
  %903 = vdwg.mxu0
  %v904 = vmax.f32 %v885, 0.0
  %v905 = vmax.f32 %v887, 0.0
  %v906 = vmax.f32 %v890, 0.0
  %v907 = vmax.f32 %v892, 0.0
  %v908 = vmax.f32 %v895, 0.0
  %v909 = vmax.f32 %v897, 0.0
  %v910 = vmax.f32 %v900, 0.0
  %v911 = vmax.f32 %v902, 0.0
  %v912 = vld [vmem:[%s5] sm:$0xff]
  %v913 = vld [vmem:[%s5 + $0x8] sm:$0xff]
  %v914 = vld [vmem:[%s5 + $0x10] sm:$0xff]
  %v915 = vld [vmem:[%s5 + $0x18] sm:$0xff]
  %v916 = vld [vmem:[%s5 + $0x20] sm:$0xff]
  %v917 = vld [vmem:[%s5 + $0x28] sm:$0xff]
  %v918 = vld [vmem:[%s5 + $0x30] sm:$0xff]
  %v919 = vld [vmem:[%s5 + $0x38] sm:$0xff]
  %921 = vset.pattern.permute.xlu0 0
  %922 = vperm.xlu0 %921, %v912
  %v923 = vpop.permute.xlu0 %922
  %926 = vset.pattern.permute.xlu0 0
  %927 = vperm.xlu0 %926, %v913
  %v928 = vpop.permute.xlu0 %927
  %931 = vset.pattern.permute.xlu0 0
  %932 = vperm.xlu0 %931, %v914
  %v933 = vpop.permute.xlu0 %932
  %936 = vset.pattern.permute.xlu0 0
  %937 = vperm.xlu0 %936, %v915
  %v938 = vpop.permute.xlu0 %937
  %941 = vset.pattern.permute.xlu0 0
  %942 = vperm.xlu0 %941, %v916
  %v943 = vpop.permute.xlu0 %942
  %946 = vset.pattern.permute.xlu0 0
  %947 = vperm.xlu0 %946, %v917
  %v948 = vpop.permute.xlu0 %947
  %951 = vset.pattern.permute.xlu0 0
  %952 = vperm.xlu0 %951, %v918
  %v953 = vpop.permute.xlu0 %952
  %956 = vset.pattern.permute.xlu0 0
  %957 = vperm.xlu0 %956, %v919
  %v958 = vpop.permute.xlu0 %957
  %v960 = vmul.f32 %v904, %v923
  %v961 = vmul.f32 %v905, %v928
  %v962 = vmul.f32 %v906, %v933
  %v963 = vmul.f32 %v907, %v938
  %v964 = vmul.f32 %v908, %v943
  %v965 = vmul.f32 %v909, %v948
  %v966 = vmul.f32 %v910, %v953
  %v967 = vmul.f32 %v911, %v958
  %v968 = vadd.f32 %v960, %v961
  %v969 = vadd.f32 %v968, %v962
  %v970 = vadd.f32 %v969, %v963
  %v971 = vadd.f32 %v970, %v964
  %v972 = vadd.f32 %v971, %v965
  %v973 = vadd.f32 %v972, %v966
  %v974 = vadd.f32 %v973, %v967
  %v975 = vrot.slane %v974, 4
  %v976 = vadd.f32 %v974, %v975
  %v977 = vrot.slane %v976, 2
  %v978 = vadd.f32 %v976, %v977
  %v979 = vrot.slane %v978, 1
  %v980 = vadd.f32 %v978, %v979
  %s981 = sld [smem:[#allocation2]]
  %v982 = vstv %s981
  %v983 = vadd.f32 %v980, %v982
  %984 = vst [vmem:[%s7] sm:$0x1] %v983
  // Predicated region
  $region30: #{mlp_forward.1} parent=0 // pred_check
    _
  $region31: #{mlp_forward.1} parent=0 // pred_check_branch
    %986 = sbr.rel (0) target = $region33
  $region32: #{mlp_forward.1} parent=0 // pred_region
    _
  $region33: #{mlp_forward.1} parent=0 // pred_fallthru
    _
  // Predicated region
  $region34: #{mlp_forward.1} parent=0 // pred_check
    _
  $region35: #{mlp_forward.1} parent=0 // pred_check_branch
    %988 = sbr.rel (0) target = $region37
  $region36: #{mlp_forward.1} parent=0 // pred_region
    _
  $region37: #{mlp_forward.1} parent=0 // pred_fallthru
    _

</llo_original>
